<compile_context>
chip_gen: v7x
topology: tpu7x:2x2x1
jax: 0.10.0
libtpu: 0.0.40
codegen_flags: <defaults>
</compile_context>

<pallas_src>
import functools

import jax
import jax.numpy as jnp
from jax import lax
from jax.experimental import pallas as pl
from jax.experimental.pallas import tpu as pltpu

_TARGET_BLOCK_BYTES = 2 * 1024 * 1024     # ~2 MiB per input block per step
_VMEM_LIMIT_BYTES = 32 * 1024 * 1024
_MIN_PALLAS_ELEMENTS = 16384              # below this, XLA's fused loss wins


def _round_up(x, m):
    return ((x + m - 1) // m) * m


def _bce_loss_reference(pred, target, alpha, hard_labels=False):
    """Pure-JAX forward; also used as the small-input fallback path."""
    p = jnp.reshape(pred, (-1,)).astype(jnp.float32)
    t = jnp.reshape(target, (-1,)).astype(jnp.float32)
    # PyTorch clamps each log term at -100.
    log_p = jnp.maximum(jnp.log(p), -100.0)
    log_1mp = jnp.maximum(jnp.log(1.0 - p), -100.0)
    if hard_labels:
        bce = -jnp.where(t > 0.5, log_p, log_1mp)
    else:
        bce = -(t * log_p + (1.0 - t) * log_1mp)
    if alpha > 0:
        w = t * alpha + (1.0 - t) * (1.0 - alpha)
        return jnp.sum(bce * w) / jnp.float32(t.size)
    return jnp.sum(bce) / jnp.float32(t.size)


def _bce_sum_kernel(pred_ref, target_ref, out_ref, acc_ref, *,
                    c0n, c1n, use_alpha, hard_labels,
                    n_rows, tile_rows, blocks_per_core, need_mask):
    c = pl.program_id(0)          # "parallel" axis (megacore split on v7x)
    i = pl.program_id(1)          # "arbitrary" reduction axis

    @pl.when(i == 0)
    def _init():
        acc_ref[...] = jnp.zeros_like(acc_ref)

    # Inputs stream in their native dtype; cast after load.
    p = pred_ref[...].astype(jnp.float32)
    t = target_ref[...].astype(jnp.float32)

    neg100 = jnp.float32(-100.0)
    if hard_labels:
        # Single log per element; exact for {0,1} targets.
        q = jnp.where(t > 0.5, p, 1.0 - p)
        core = jnp.maximum(jnp.log(q), neg100)       # == t*log(p) + (1-t)*log(1-p)
    else:
        # TODO(synk): PyTorch uses log1p(-x); jnp.log(1-p) hits the -100 clamp slightly
        # earlier for p ~ 1.0 (identical for ordinary post-sigmoid inputs).
        log_p = jnp.maximum(jnp.log(p), neg100)
        log_1mp = jnp.maximum(jnp.log(1.0 - p), neg100)
        core = t * (log_p - log_1mp) + log_1mp        # == t*log(p) + (1-t)*log(1-p)

    if use_alpha:
        # loss = BCE * (t*alpha + (1-t)*(1-alpha)); the BCE negation is folded into
        # the precomputed constants c0n = 1-2*alpha, c1n = alpha-1.
        loss = core * (t * jnp.float32(c0n) + jnp.float32(c1n))
    else:
        loss = -core

    if need_mask:
        # Zero rows past the true row count (ragged tail and/or phantom blocks).
        row0 = (c * blocks_per_core + i) * tile_rows
        rows_here = lax.broadcasted_iota(jnp.int32, loss.shape, 0) + row0
        loss = jnp.where(rows_here < n_rows, loss, 0.0)

    lanes = loss.shape[1]
    # Sublane-group partial sums: layout-trivial reshape + pure-VPU cross-slab adds.
    acc_ref[...] += loss.reshape(tile_rows // 8, 8, lanes).sum(axis=0)

    @pl.when(i == blocks_per_core - 1)
    def _finalize():
        out_ref[0, 0] = jnp.sum(acc_ref[...])        # single cross-lane reduce per core


def get_loss_forward(pred, target, trans_feat=None, alpha=0.5, *,
                     hard_labels=False,
                     min_pallas_elements=_MIN_PALLAS_ELEMENTS,
                     max_block_rows=None):
    """JAX/Pallas equivalent of get_loss(alpha).forward(pred, target, trans_feat)."""
    del trans_feat  # unused, same as the PyTorch module

    n_total = int(target.size)
    assert int(pred.size) == n_total, (pred.shape, target.shape)

    # Lane-dense 2D view (free reshapes, no padding): fold trailing target dims into
    # the lane axis until it is at least 128 wide.
    lanes = 1
    k = target.ndim
    while k > 0 and lanes < 128:
        k -= 1
        lanes *= int(target.shape[k])
    lanes = max(lanes, 1)
    rows = n_total // lanes

    itemsize = max(jnp.dtype(pred.dtype).itemsize, jnp.dtype(target.dtype).itemsize)
    use_pallas = (
        n_total >= max(int(min_pallas_elements), 1)
        and rows >= 8
        and 8 * lanes * itemsize <= _TARGET_BLOCK_BYTES   # one 8-row block fits budget
    )
    if not use_pallas:
        # Small / awkward shapes: XLA's fused elementwise+reduce beats kernel dispatch.
        return _bce_loss_reference(pred, target, alpha, hard_labels=hard_labels)

    pred2 = jnp.reshape(pred, (rows, lanes))      # contiguous -> free
    target2 = jnp.reshape(target, (rows, lanes))

    # Balanced row tiling (row padding always < 8*num_blocks, never a whole tile).
    max_rows = max(8, (_TARGET_BLOCK_BYTES // (lanes * itemsize)) // 8 * 8)
    if max_block_rows is not None:
        max_rows = max(8, (int(max_block_rows) // 8) * 8)
    blocks_min = pl.cdiv(rows, max_rows)
    num_par = 2 if blocks_min >= 2 else 1          # engage both TCs on v7x
    blocks_per_core = pl.cdiv(blocks_min, num_par)
    total_blocks = num_par * blocks_per_core
    tile_rows = min(_round_up(pl.cdiv(rows, total_blocks), 8), max_rows)
    need_mask = tile_rows * total_blocks != rows
    last_block = pl.cdiv(rows, tile_rows) - 1      # clamp phantom blocks in-bounds

    kernel = functools.partial(
        _bce_sum_kernel,
        c0n=float(1.0 - 2.0 * alpha),
        c1n=float(alpha - 1.0),
        use_alpha=bool(alpha > 0),
        hard_labels=bool(hard_labels),
        n_rows=rows,
        tile_rows=tile_rows,
        blocks_per_core=blocks_per_core,
        need_mask=need_mask,
    )

    def in_index(c, i):
        return (jnp.minimum(c * blocks_per_core + i, last_block), 0)

    cost = pl.CostEstimate(
        flops=12 * n_total,
        transcendentals=(1 if hard_labels else 2) * n_total,
        bytes_accessed=n_total * (pred2.dtype.itemsize + target2.dtype.itemsize)
        + 4 * num_par,
    )

    partials = pl.pallas_call(
        kernel,
        out_shape=jax.ShapeDtypeStruct((num_par, 1), jnp.float32),
        grid_spec=pltpu.PrefetchScalarGridSpec(
            num_scalar_prefetch=0,
            grid=(num_par, blocks_per_core),
            in_specs=[
                pl.BlockSpec((tile_rows, lanes), in_index),
                pl.BlockSpec((tile_rows, lanes), in_index),
            ],
            out_specs=pl.BlockSpec((1, 1), lambda c, i: (c, 0),
                                   memory_space=pltpu.SMEM),
            scratch_shapes=[pltpu.VMEM((8, lanes), jnp.float32)],
        ),
        compiler_params=pltpu.CompilerParams(
            dimension_semantics=("parallel", "arbitrary"),
            vmem_limit_bytes=_VMEM_LIMIT_BYTES,
        ),
        cost_estimate=cost,
    )(pred2, target2)

    return jnp.sum(partials) / jnp.float32(n_total)


if __name__ == "__main__":
    key = jax.random.PRNGKey(0)
    k1, k2, k3 = jax.random.split(key, 3)

    # PointNet2 binary head: pred = sigmoid(logits) shaped (B, N, 1), target (B, N).
    B, N = 24, 1024
    logits = jax.random.normal(k1, (B, N, 1), dtype=jnp.float32)
    pred = jax.nn.sigmoid(logits)
    target = jax.random.bernoulli(k2, p=0.5, shape=(B, N)).astype(jnp.float32)
    trans_feat = jax.random.normal(k3, (B, 64, 64), dtype=jnp.float32)  # unused by loss

    # 1) Main Pallas path (single lane-dense block, alpha-weighted branch).
    loss = jax.block_until_ready(get_loss_forward(pred, target, trans_feat, alpha=0.5))
    ref = _bce_loss_reference(pred, target, alpha=0.5)
    assert jnp.allclose(loss, ref, rtol=1e-5, atol=1e-6), (loss, ref)

    # 2) Multi-block path: 2-way "parallel" core split + multi-step reduction axis +
    #    ragged-tail masking (forced via a small per-block row cap).
    loss2 = jax.block_until_ready(
        get_loss_forward(pred, target, trans_feat, alpha=0.25,
                         min_pallas_elements=1, max_block_rows=8))
    ref2 = _bce_loss_reference(pred, target, alpha=0.25)
    assert jnp.allclose(loss2, ref2, rtol=1e-5, atol=1e-6), (loss2, ref2)

    # 3) alpha <= 0 branch (plain nn.BCELoss mean) through the kernel.
    loss3 = jax.block_until_ready(
        get_loss_forward(pred, target, trans_feat, alpha=0.0, min_pallas_elements=1))
    ref3 = _bce_loss_reference(pred, target, alpha=0.0)
    assert jnp.allclose(loss3, ref3, rtol=1e-5, atol=1e-6), (loss3, ref3)

    # 4) Opt-in single-log path for hard {0,1} labels (halves EUP transcendentals).
    loss4 = jax.block_until_ready(
        get_loss_forward(pred, target, trans_feat, alpha=0.5,
                         hard_labels=True, min_pallas_elements=1))
    assert jnp.allclose(loss4, ref, rtol=1e-5, atol=1e-6), (loss4, ref)

    # 5) Small-input fallback path (pure JAX) still runs and agrees.
    loss5 = jax.block_until_ready(
        get_loss_forward(pred[:2, :64], target[:2, :64], None, alpha=0.5))
    ref5 = _bce_loss_reference(pred[:2, :64], target[:2, :64], alpha=0.5)
    assert jnp.allclose(loss5, ref5, rtol=1e-5, atol=1e-6), (loss5, ref5)

    print("KERNEL_OK")
</pallas_src>

<mosaic_0001>
module attributes {stable_mosaic.version = 11 : i64} {
  func.func @_bce_sum_kernel(%arg0: i32, %arg1: i32, %arg2: memref<24x1024xf32, #tpu.memory_space<vmem>>, %arg3: memref<24x1024xf32, #tpu.memory_space<vmem>>, %arg4: memref<1x1xf32, #tpu.memory_space<smem>>, %arg5: memref<8x1024xf32, #tpu.memory_space<vmem>>) attributes {dimension_semantics = [#tpu.dimension_semantics<parallel>, #tpu.dimension_semantics<arbitrary>], iteration_bounds = array<i64: 1, 1>, scalar_prefetch = 0 : i64, scratch_operands = 1 : i64, tpu.core_type = #tpu.core_type<tc>, window_params = [{transform_indices = @transform_0, window_bounds = array<i64: 24, 1024>}, {transform_indices = @transform_1, window_bounds = array<i64: 24, 1024>}, {transform_indices = @transform_2, window_bounds = array<i64: 1, 1>}]} {
    %c0_i32 = arith.constant 0 : i32
    %0 = arith.cmpi eq, %arg1, %c0_i32 : i32
    %1 = arith.extui %0 : i1 to i32
    %c0_i32_0 = arith.constant 0 : i32
    %2 = arith.cmpi ne, %1, %c0_i32_0 : i32
    scf.if %2 {
      %cst_15 = arith.constant 0.000000e+00 : f32
      %29 = vector.broadcast %cst_15 : f32 to vector<8x1024xf32>
      %c0_16 = arith.constant 0 : index
      %c0_17 = arith.constant 0 : index
      %30 = vector.load %arg5[%c0_16, %c0_17] : memref<8x1024xf32, #tpu.memory_space<vmem>>, vector<8x1024xf32>
      tpu.vector_store %arg5[%c0_16, %c0_17], %29 {strides = array<i32>} : memref<8x1024xf32, #tpu.memory_space<vmem>>, vector<8x1024xf32>,
    } else {
    }
    %c0 = arith.constant 0 : index
    %c0_1 = arith.constant 0 : index
    %3 = vector.load %arg2[%c0, %c0_1] : memref<24x1024xf32, #tpu.memory_space<vmem>>, vector<24x1024xf32>
    %c0_2 = arith.constant 0 : index
    %c0_3 = arith.constant 0 : index
    %4 = vector.load %arg3[%c0_2, %c0_3] : memref<24x1024xf32, #tpu.memory_space<vmem>>, vector<24x1024xf32>
    %5 = math.log %3 : vector<24x1024xf32>
    %cst = arith.constant -1.000000e+02 : f32
    %6 = vector.broadcast %cst : f32 to vector<24x1024xf32>
    %7 = arith.maximumf %5, %6 : vector<24x1024xf32>
    %cst_4 = arith.constant 1.000000e+00 : f32
    %8 = vector.broadcast %cst_4 : f32 to vector<24x1024xf32>
    %9 = arith.subf %8, %3 : vector<24x1024xf32>
    %10 = math.log %9 : vector<24x1024xf32>
    %cst_5 = arith.constant -1.000000e+02 : f32
    %11 = vector.broadcast %cst_5 : f32 to vector<24x1024xf32>
    %12 = arith.maximumf %10, %11 : vector<24x1024xf32>
    %13 = arith.subf %7, %12 : vector<24x1024xf32>
    %14 = arith.mulf %4, %13 : vector<24x1024xf32>
    %15 = arith.addf %14, %12 : vector<24x1024xf32>
    %cst_6 = arith.constant 0.000000e+00 : f32
    %16 = vector.broadcast %cst_6 : f32 to vector<24x1024xf32>
    %17 = arith.mulf %4, %16 : vector<24x1024xf32>
    %cst_7 = arith.constant -5.000000e-01 : f32
    %18 = vector.broadcast %cst_7 : f32 to vector<24x1024xf32>
    %19 = arith.addf %17, %18 : vector<24x1024xf32>
    %20 = arith.mulf %15, %19 : vector<24x1024xf32>
    %c0_8 = arith.constant 0 : index
    %c0_9 = arith.constant 0 : index
    %21 = vector.load %arg5[%c0_8, %c0_9] : memref<8x1024xf32, #tpu.memory_space<vmem>>, vector<8x1024xf32>
    %22 = vector.shape_cast %20 : vector<24x1024xf32> to vector<3x8x1024xf32>
    %cst_10 = arith.constant dense<0.000000e+00> : vector<8x1024xf32>
    %23 = vector.multi_reduction <add>, %22, %cst_10 [0] : vector<3x8x1024xf32> to vector<8x1024xf32>
    %24 = arith.addf %21, %23 : vector<8x1024xf32>
    %c0_11 = arith.constant 0 : index
    %c0_12 = arith.constant 0 : index
    %25 = vector.load %arg5[%c0_11, %c0_12] : memref<8x1024xf32, #tpu.memory_space<vmem>>, vector<8x1024xf32>
    tpu.vector_store %arg5[%c0_11, %c0_12], %24 {strides = array<i32>} : memref<8x1024xf32, #tpu.memory_space<vmem>>, vector<8x1024xf32>,
    %c0_i32_13 = arith.constant 0 : i32
    %26 = arith.cmpi eq, %arg1, %c0_i32_13 : i32
    %27 = arith.extui %26 : i1 to i32
    %c0_i32_14 = arith.constant 0 : i32
    %28 = arith.cmpi ne, %27, %c0_i32_14 : i32
    scf.if %28 {
      %c0_15 = arith.constant 0 : index
      %c0_16 = arith.constant 0 : index
      %29 = vector.load %arg5[%c0_15, %c0_16] : memref<8x1024xf32, #tpu.memory_space<vmem>>, vector<8x1024xf32>
      %30 = vector.shape_cast %29 : vector<8x1024xf32> to vector<1x8x1024xf32>
      %cst_17 = arith.constant dense<0.000000e+00> : vector<1xf32>
      %31 = vector.multi_reduction <add>, %30, %cst_17 [1, 2] : vector<1x8x1024xf32> to vector<1xf32>
      %32 = vector.shape_cast %31 : vector<1xf32> to vector<1x1x1xf32>
      %33 = vector.extract %32[0, 0, 0] : f32 from vector<1x1x1xf32>
      %c0_18 = arith.constant 0 : index
      %c0_19 = arith.constant 0 : index
      %34 = memref.load %arg4[%c0_18, %c0_19] : memref<1x1xf32, #tpu.memory_space<smem>>
      memref.store %33, %arg4[%c0_18, %c0_19] : memref<1x1xf32, #tpu.memory_space<smem>>
    } else {
    }
    return
  }
  func.func @transform_0(%arg0: i32, %arg1: i32) -> (i32, i32) {
    %c1_i32 = arith.constant 1 : i32
    %0 = arith.muli %arg0, %c1_i32 : i32
    %1 = arith.addi %0, %arg1 : i32
    %c0_i32 = arith.constant 0 : i32
    %2 = arith.minsi %1, %c0_i32 : i32
    %c0_i32_0 = arith.constant 0 : i32
    %c0_i32_1 = arith.constant 0 : i32
    return %2, %c0_i32_0 : i32, i32
  }
  func.func @transform_1(%arg0: i32, %arg1: i32) -> (i32, i32) {
    %c1_i32 = arith.constant 1 : i32
    %0 = arith.muli %arg0, %c1_i32 : i32
    %1 = arith.addi %0, %arg1 : i32
    %c0_i32 = arith.constant 0 : i32
    %2 = arith.minsi %1, %c0_i32 : i32
    %c0_i32_0 = arith.constant 0 : i32
    %c0_i32_1 = arith.constant 0 : i32
    return %2, %c0_i32_0 : i32, i32
  }
  func.func @transform_2(%arg0: i32, %arg1: i32) -> (i32, i32) {
    %c0_i32 = arith.constant 0 : i32
    %c0_i32_0 = arith.constant 0 : i32
    return %arg0, %c0_i32 : i32, i32
  }
}

</mosaic_0001>

<llo_original>
// kernel: tpu_custom_call.1
$region0: #{tpu_custom_call.1}
  #allocation0 [shape = 'u32[]', space=smem, size = 0x4, offset = 0x4, fixed_abs, tag = 'smem constant byte address 0x4 - core index']
  #allocation1 [shape = 'u32[144,128]{1,0:T(1,128)}', space=vmem, size = 0x12000, scoped, tag = 'internal scratch']
  #allocation2 [shape = 'f32[8,1024]{1,0:T(8,128)}', space=vmem, size = 0x8000, scoped, tag = 'scratch operand']
  %s0 = inlined_call_operand.hbm [shape: f32[24,1024], index: 0, kind: input, shape index: {}]
  %s1 = inlined_call_operand.hbm [shape: f32[24,1024], index: 1, kind: input, shape index: {}]
  %s2 = inlined_call_operand.hbm [shape: f32[1,1], index: 2, kind: output, shape index: {}]
  %s3 = sld [smem:[#allocation0]]
  $region34: #{tpu_custom_call.1} parent=0
    _
  %s5 = ssub.s32 1, %s3
  %s6 = scalar_select 0, %s5, %s3
  $region1: #{tpu_custom_call.1} parent=0
    #allocation3 [shape = 'u8[98304]{0}', space=vmem, size = 0x18000, scoped, tag = 'input window, operand 0, single buffered']
    #allocation4 [shape = 's32[1]{0}', space=sflag, size = 0x4, scoped, tag = 'scoped memory for tpu_custom_call.1']
    #allocation5 [shape = 's32[1]{0}', space=sflag, size = 0x4, scoped, tag = 'scoped memory for tpu_custom_call.1']
    #allocation6 [shape = 'u8[98304]{0}', space=vmem, size = 0x18000, scoped, tag = 'input window, operand 1, single buffered']
    #allocation7 [shape = 's32[1]{0}', space=sflag, size = 0x4, scoped, tag = 'scoped memory for tpu_custom_call.1']
    #allocation8 [shape = 'u8[512]{0}', space=smem, size = 0x200, scoped, tag = 'output window, operand 0, single buffered']
    %7 = vsyncpa [#allocation4], 0
    %8 = vsyncpa [#allocation7], 0
    %9 = vsyncpa [#allocation5], 0
    // Predicated region
    $region2: #{tpu_custom_call.1} parent=1 // pred_check
      _
    $region3: #{tpu_custom_call.1} parent=1 // pred_check_branch
      %11 = sbr.rel (0) target = $region5
    $region4: #{tpu_custom_call.1} parent=1 // pred_region
      %s12 = sadd.s32 0, 0
      %p13 = scmp.lt.s32.totalorder %s12, 0
      %s14 = scalar_select %p13, %s12, 0
      %s15 = smul.u32 3, %s14
      %s17 = ssub.s32 3072, 3072
      %18 = vsyncadd [#allocation4], %s17
      %s19 = smul.addr %s15, 8
      %s20 = smul.addr %s19, 128
      %s21 = scalar_lea.hbm %s0, %s20
      %s22 = sshll.u32 [#allocation3], 4
      %s23 = int_to_ptr.vmem [resolvable:$true] %s22
      %28 = dma.hbm_to_vmem [thread:$0]  %s21, 3072, %s23, [#allocation4], 1024, 1024, 64
    $region5: #{tpu_custom_call.1} parent=1 // pred_fallthru
      _
    // Predicated region
    $region6: #{tpu_custom_call.1} parent=1 // pred_check
      _
    $region7: #{tpu_custom_call.1} parent=1 // pred_check_branch
      %30 = sbr.rel (0) target = $region9
    $region8: #{tpu_custom_call.1} parent=1 // pred_region
      %s31 = sadd.s32 0, 0
      %p32 = scmp.lt.s32.totalorder %s31, 0
      %s33 = scalar_select %p32, %s31, 0
      %s34 = smul.u32 3, %s33
      %s36 = ssub.s32 3072, 3072
      %37 = vsyncadd [#allocation7], %s36
      %s38 = smul.addr %s34, 8
      %s39 = smul.addr %s38, 128
      %s40 = scalar_lea.hbm %s1, %s39
      %s41 = sshll.u32 [#allocation6], 4
      %s42 = int_to_ptr.vmem [resolvable:$true] %s41
      %47 = dma.hbm_to_vmem [thread:$0]  %s40, 3072, %s42, [#allocation7], 1024, 1024, 64
    $region9: #{tpu_custom_call.1} parent=1 // pred_fallthru
      _
    // Predicated region
    $region10: #{tpu_custom_call.1} parent=1 // pred_check
      _
    $region11: #{tpu_custom_call.1} parent=1 // pred_check_branch
      %49 = sbr.rel (0) target = $region13
    $region12: #{tpu_custom_call.1} parent=1 // pred_region
      %50 = dma.done [#allocation4], 3072
    $region13: #{tpu_custom_call.1} parent=1 // pred_fallthru
      _
    // Predicated region
    $region14: #{tpu_custom_call.1} parent=1 // pred_check
      _
    $region15: #{tpu_custom_call.1} parent=1 // pred_check_branch
      %52 = sbr.rel (0) target = $region17
    $region16: #{tpu_custom_call.1} parent=1 // pred_region
      %53 = dma.done [#allocation7], 3072
    $region17: #{tpu_custom_call.1} parent=1 // pred_fallthru
      _
    %s54 = sadd.s32 0, 0
    %p55 = scmp.lt.s32.totalorder %s54, 0
    %s56 = scalar_select %p55, %s54, 0
    %s57 = smul.u32 3, %s56
    %s58 = sadd.s32 0, 0
    %p59 = scmp.lt.s32.totalorder %s58, 0
    %s60 = scalar_select %p59, %s58, 0
    %s61 = smul.u32 3, %s60
    %p62 = scmp.eq.s32.totalorder 0, 0
    // Predicated region
    $region18: #{tpu_custom_call.1} parent=1 // pred_check
      %p63 = pneg %p62
    $region19: #{tpu_custom_call.1} parent=1 // pred_check_branch
      %65 = sbr.rel (%p63) target = $region21
    $region20: #{tpu_custom_call.1} parent=1 // pred_region
      %66 = vst [vmem:[#allocation2] sm:$0xff] 0.0
      %67 = vst [vmem:[#allocation2 + $0x8] sm:$0xff] 0.0
      %68 = vst [vmem:[#allocation2 + $0x10] sm:$0xff] 0.0
      %69 = vst [vmem:[#allocation2 + $0x18] sm:$0xff] 0.0
      %70 = vst [vmem:[#allocation2 + $0x20] sm:$0xff] 0.0
      %71 = vst [vmem:[#allocation2 + $0x28] sm:$0xff] 0.0
      %72 = vst [vmem:[#allocation2 + $0x30] sm:$0xff] 0.0
      %73 = vst [vmem:[#allocation2 + $0x38] sm:$0xff] 0.0
    $region21: #{tpu_custom_call.1} parent=1 // pred_fallthru
      _
    %v74 = vld [vmem:[#allocation3] sm:$0xff]
    %v75 = vld [vmem:[#allocation3 + $0x8] sm:$0xff]
    %v76 = vld [vmem:[#allocation3 + $0x10] sm:$0xff]
    %v77 = vld [vmem:[#allocation3 + $0x18] sm:$0xff]
    %v78 = vld [vmem:[#allocation3 + $0x20] sm:$0xff]
    %v79 = vld [vmem:[#allocation3 + $0x28] sm:$0xff]
    %v80 = vld [vmem:[#allocation3 + $0x30] sm:$0xff]
    %v81 = vld [vmem:[#allocation3 + $0x38] sm:$0xff]
    %v82 = vld [vmem:[#allocation3 + $0x40] sm:$0xff]
    %v83 = vld [vmem:[#allocation3 + $0x48] sm:$0xff]
    %v84 = vld [vmem:[#allocation3 + $0x50] sm:$0xff]
    %v85 = vld [vmem:[#allocation3 + $0x58] sm:$0xff]
    %v86 = vld [vmem:[#allocation3 + $0x60] sm:$0xff]
    %v87 = vld [vmem:[#allocation3 + $0x68] sm:$0xff]
    %v88 = vld [vmem:[#allocation3 + $0x70] sm:$0xff]
    %v89 = vld [vmem:[#allocation3 + $0x78] sm:$0xff]
    %v90 = vld [vmem:[#allocation3 + $0x80] sm:$0xff]
    %v91 = vld [vmem:[#allocation3 + $0x88] sm:$0xff]
    %v92 = vld [vmem:[#allocation3 + $0x90] sm:$0xff]
    %v93 = vld [vmem:[#allocation3 + $0x98] sm:$0xff]
    %v94 = vld [vmem:[#allocation3 + $0xa0] sm:$0xff]
    %v95 = vld [vmem:[#allocation3 + $0xa8] sm:$0xff]
    %v96 = vld [vmem:[#allocation3 + $0xb0] sm:$0xff]
    %v97 = vld [vmem:[#allocation3 + $0xb8] sm:$0xff]
    %v98 = vld [vmem:[#allocation6] sm:$0xff]
    %v99 = vld [vmem:[#allocation6 + $0x8] sm:$0xff]
    %v100 = vld [vmem:[#allocation6 + $0x10] sm:$0xff]
    %v101 = vld [vmem:[#allocation6 + $0x18] sm:$0xff]
    %v102 = vld [vmem:[#allocation6 + $0x20] sm:$0xff]
    %v103 = vld [vmem:[#allocation6 + $0x28] sm:$0xff]
    %v104 = vld [vmem:[#allocation6 + $0x30] sm:$0xff]
    %v105 = vld [vmem:[#allocation6 + $0x38] sm:$0xff]
    %v106 = vld [vmem:[#allocation6 + $0x40] sm:$0xff]
    %v107 = vld [vmem:[#allocation6 + $0x48] sm:$0xff]
    %v108 = vld [vmem:[#allocation6 + $0x50] sm:$0xff]
    %v109 = vld [vmem:[#allocation6 + $0x58] sm:$0xff]
    %v110 = vld [vmem:[#allocation6 + $0x60] sm:$0xff]
    %v111 = vld [vmem:[#allocation6 + $0x68] sm:$0xff]
    %v112 = vld [vmem:[#allocation6 + $0x70] sm:$0xff]
    %v113 = vld [vmem:[#allocation6 + $0x78] sm:$0xff]
    %v114 = vld [vmem:[#allocation6 + $0x80] sm:$0xff]
    %v115 = vld [vmem:[#allocation6 + $0x88] sm:$0xff]
    %v116 = vld [vmem:[#allocation6 + $0x90] sm:$0xff]
    %v117 = vld [vmem:[#allocation6 + $0x98] sm:$0xff]
    %v118 = vld [vmem:[#allocation6 + $0xa0] sm:$0xff]
    %v119 = vld [vmem:[#allocation6 + $0xa8] sm:$0xff]
    %v120 = vld [vmem:[#allocation6 + $0xb0] sm:$0xff]
    %v121 = vld [vmem:[#allocation6 + $0xb8] sm:$0xff]
    %v122 = vlog2.pop %v74
    %v123 = vmul.f32 %v122, 0.6931472
    %v124 = vlog2.pop %v75
    %v125 = vmul.f32 %v124, 0.6931472
    %v126 = vlog2.pop %v76
    %v127 = vmul.f32 %v126, 0.6931472
    %v128 = vlog2.pop %v77
    %v129 = vmul.f32 %v128, 0.6931472
    %v130 = vlog2.pop %v78
    %v131 = vmul.f32 %v130, 0.6931472
    %v132 = vlog2.pop %v79
    %v133 = vmul.f32 %v132, 0.6931472
    %v134 = vlog2.pop %v80
    %v135 = vmul.f32 %v134, 0.6931472
    %v136 = vlog2.pop %v81
    %v137 = vmul.f32 %v136, 0.6931472
    %v138 = vlog2.pop %v82
    %v139 = vmul.f32 %v138, 0.6931472
    %v140 = vlog2.pop %v83
    %v141 = vmul.f32 %v140, 0.6931472
    %v142 = vlog2.pop %v84
    %v143 = vmul.f32 %v142, 0.6931472
    %v144 = vlog2.pop %v85
    %v145 = vmul.f32 %v144, 0.6931472
    %v146 = vlog2.pop %v86
    %v147 = vmul.f32 %v146, 0.6931472
    %v148 = vlog2.pop %v87
    %v149 = vmul.f32 %v148, 0.6931472
    %v150 = vlog2.pop %v88
    %v151 = vmul.f32 %v150, 0.6931472
    %v152 = vlog2.pop %v89
    %v153 = vmul.f32 %v152, 0.6931472
    %v154 = vlog2.pop %v90
    %v155 = vmul.f32 %v154, 0.6931472
    %v156 = vlog2.pop %v91
    %v157 = vmul.f32 %v156, 0.6931472
    %v158 = vlog2.pop %v92
    %v159 = vmul.f32 %v158, 0.6931472
    %v160 = vlog2.pop %v93
    %v161 = vmul.f32 %v160, 0.6931472
    %v162 = vlog2.pop %v94
    %v163 = vmul.f32 %v162, 0.6931472
    %v164 = vlog2.pop %v95
    %v165 = vmul.f32 %v164, 0.6931472
    %v166 = vlog2.pop %v96
    %v167 = vmul.f32 %v166, 0.6931472
    %v168 = vlog2.pop %v97
    %v169 = vmul.f32 %v168, 0.6931472
    %v170 = vmax.f32 %v123, -100.0
    %v171 = vmax.f32 %v125, -100.0
    %v172 = vmax.f32 %v127, -100.0
    %v173 = vmax.f32 %v129, -100.0
    %v174 = vmax.f32 %v131, -100.0
    %v175 = vmax.f32 %v133, -100.0
    %v176 = vmax.f32 %v135, -100.0
    %v177 = vmax.f32 %v137, -100.0
    %v178 = vmax.f32 %v139, -100.0
    %v179 = vmax.f32 %v141, -100.0
    %v180 = vmax.f32 %v143, -100.0
    %v181 = vmax.f32 %v145, -100.0
    %v182 = vmax.f32 %v147, -100.0
    %v183 = vmax.f32 %v149, -100.0
    %v184 = vmax.f32 %v151, -100.0
    %v185 = vmax.f32 %v153, -100.0
    %v186 = vmax.f32 %v155, -100.0
    %v187 = vmax.f32 %v157, -100.0
    %v188 = vmax.f32 %v159, -100.0
    %v189 = vmax.f32 %v161, -100.0
    %v190 = vmax.f32 %v163, -100.0
    %v191 = vmax.f32 %v165, -100.0
    %v192 = vmax.f32 %v167, -100.0
    %v193 = vmax.f32 %v169, -100.0
    %v194 = vsub.f32 1.0, %v74
    %v195 = vsub.f32 1.0, %v75
    %v196 = vsub.f32 1.0, %v76
    %v197 = vsub.f32 1.0, %v77
    %v198 = vsub.f32 1.0, %v78
    %v199 = vsub.f32 1.0, %v79
    %v200 = vsub.f32 1.0, %v80
    %v201 = vsub.f32 1.0, %v81
    %v202 = vsub.f32 1.0, %v82
    %v203 = vsub.f32 1.0, %v83
    %v204 = vsub.f32 1.0, %v84
    %v205 = vsub.f32 1.0, %v85
    %v206 = vsub.f32 1.0, %v86
    %v207 = vsub.f32 1.0, %v87
    %v208 = vsub.f32 1.0, %v88
    %v209 = vsub.f32 1.0, %v89
    %v210 = vsub.f32 1.0, %v90
    %v211 = vsub.f32 1.0, %v91
    %v212 = vsub.f32 1.0, %v92
    %v213 = vsub.f32 1.0, %v93
    %v214 = vsub.f32 1.0, %v94
    %v215 = vsub.f32 1.0, %v95
    %v216 = vsub.f32 1.0, %v96
    %v217 = vsub.f32 1.0, %v97
    %v218 = vlog2.pop %v194
    %v219 = vmul.f32 %v218, 0.6931472
    %v220 = vlog2.pop %v195
    %v221 = vmul.f32 %v220, 0.6931472
    %v222 = vlog2.pop %v196
    %v223 = vmul.f32 %v222, 0.6931472
    %v224 = vlog2.pop %v197
    %v225 = vmul.f32 %v224, 0.6931472
    %v226 = vlog2.pop %v198
    %v227 = vmul.f32 %v226, 0.6931472
    %v228 = vlog2.pop %v199
    %v229 = vmul.f32 %v228, 0.6931472
    %v230 = vlog2.pop %v200
    %v231 = vmul.f32 %v230, 0.6931472
    %v232 = vlog2.pop %v201
    %v233 = vmul.f32 %v232, 0.6931472
    %v234 = vlog2.pop %v202
    %v235 = vmul.f32 %v234, 0.6931472
    %v236 = vlog2.pop %v203
    %v237 = vmul.f32 %v236, 0.6931472
    %v238 = vlog2.pop %v204
    %v239 = vmul.f32 %v238, 0.6931472
    %v240 = vlog2.pop %v205
    %v241 = vmul.f32 %v240, 0.6931472
    %v242 = vlog2.pop %v206
    %v243 = vmul.f32 %v242, 0.6931472
    %v244 = vlog2.pop %v207
    %v245 = vmul.f32 %v244, 0.6931472
    %v246 = vlog2.pop %v208
    %v247 = vmul.f32 %v246, 0.6931472
    %v248 = vlog2.pop %v209
    %v249 = vmul.f32 %v248, 0.6931472
    %v250 = vlog2.pop %v210
    %v251 = vmul.f32 %v250, 0.6931472
    %v252 = vlog2.pop %v211
    %v253 = vmul.f32 %v252, 0.6931472
    %v254 = vlog2.pop %v212
    %v255 = vmul.f32 %v254, 0.6931472
    %v256 = vlog2.pop %v213
    %v257 = vmul.f32 %v256, 0.6931472
    %v258 = vlog2.pop %v214
    %v259 = vmul.f32 %v258, 0.6931472
    %v260 = vlog2.pop %v215
    %v261 = vmul.f32 %v260, 0.6931472
    %v262 = vlog2.pop %v216
    %v263 = vmul.f32 %v262, 0.6931472
    %v264 = vlog2.pop %v217
    %v265 = vmul.f32 %v264, 0.6931472
    %v266 = vmax.f32 %v219, -100.0
    %v267 = vmax.f32 %v221, -100.0
    %v268 = vmax.f32 %v223, -100.0
    %v269 = vmax.f32 %v225, -100.0
    %v270 = vmax.f32 %v227, -100.0
    %v271 = vmax.f32 %v229, -100.0
    %v272 = vmax.f32 %v231, -100.0
    %v273 = vmax.f32 %v233, -100.0
    %v274 = vmax.f32 %v235, -100.0
    %v275 = vmax.f32 %v237, -100.0
    %v276 = vmax.f32 %v239, -100.0
    %v277 = vmax.f32 %v241, -100.0
    %v278 = vmax.f32 %v243, -100.0
    %v279 = vmax.f32 %v245, -100.0
    %v280 = vmax.f32 %v247, -100.0
    %v281 = vmax.f32 %v249, -100.0
    %v282 = vmax.f32 %v251, -100.0
    %v283 = vmax.f32 %v253, -100.0
    %v284 = vmax.f32 %v255, -100.0
    %v285 = vmax.f32 %v257, -100.0
    %v286 = vmax.f32 %v259, -100.0
    %v287 = vmax.f32 %v261, -100.0
    %v288 = vmax.f32 %v263, -100.0
    %v289 = vmax.f32 %v265, -100.0
    %v290 = vsub.f32 %v170, %v266
    %v291 = vsub.f32 %v171, %v267
    %v292 = vsub.f32 %v172, %v268
    %v293 = vsub.f32 %v173, %v269
    %v294 = vsub.f32 %v174, %v270
    %v295 = vsub.f32 %v175, %v271
    %v296 = vsub.f32 %v176, %v272
    %v297 = vsub.f32 %v177, %v273
    %v298 = vsub.f32 %v178, %v274
    %v299 = vsub.f32 %v179, %v275
    %v300 = vsub.f32 %v180, %v276
    %v301 = vsub.f32 %v181, %v277
    %v302 = vsub.f32 %v182, %v278
    %v303 = vsub.f32 %v183, %v279
    %v304 = vsub.f32 %v184, %v280
    %v305 = vsub.f32 %v185, %v281
    %v306 = vsub.f32 %v186, %v282
    %v307 = vsub.f32 %v187, %v283
    %v308 = vsub.f32 %v188, %v284
    %v309 = vsub.f32 %v189, %v285
    %v310 = vsub.f32 %v190, %v286
    %v311 = vsub.f32 %v191, %v287
    %v312 = vsub.f32 %v192, %v288
    %v313 = vsub.f32 %v193, %v289
    %v314 = vmul.f32 %v98, %v290
    %v315 = vmul.f32 %v99, %v291
    %v316 = vmul.f32 %v100, %v292
    %v317 = vmul.f32 %v101, %v293
    %v318 = vmul.f32 %v102, %v294
    %v319 = vmul.f32 %v103, %v295
    %v320 = vmul.f32 %v104, %v296
    %v321 = vmul.f32 %v105, %v297
    %v322 = vmul.f32 %v106, %v298
    %v323 = vmul.f32 %v107, %v299
    %v324 = vmul.f32 %v108, %v300
    %v325 = vmul.f32 %v109, %v301
    %v326 = vmul.f32 %v110, %v302
    %v327 = vmul.f32 %v111, %v303
    %v328 = vmul.f32 %v112, %v304
    %v329 = vmul.f32 %v113, %v305
    %v330 = vmul.f32 %v114, %v306
    %v331 = vmul.f32 %v115, %v307
    %v332 = vmul.f32 %v116, %v308
    %v333 = vmul.f32 %v117, %v309
    %v334 = vmul.f32 %v118, %v310
    %v335 = vmul.f32 %v119, %v311
    %v336 = vmul.f32 %v120, %v312
    %v337 = vmul.f32 %v121, %v313
    %v338 = vadd.f32 %v314, %v266
    %v339 = vadd.f32 %v315, %v267
    %v340 = vadd.f32 %v316, %v268
    %v341 = vadd.f32 %v317, %v269
    %v342 = vadd.f32 %v318, %v270
    %v343 = vadd.f32 %v319, %v271
    %v344 = vadd.f32 %v320, %v272
    %v345 = vadd.f32 %v321, %v273
    %v346 = vadd.f32 %v322, %v274
    %v347 = vadd.f32 %v323, %v275
    %v348 = vadd.f32 %v324, %v276
    %v349 = vadd.f32 %v325, %v277
    %v350 = vadd.f32 %v326, %v278
    %v351 = vadd.f32 %v327, %v279
    %v352 = vadd.f32 %v328, %v280
    %v353 = vadd.f32 %v329, %v281
    %v354 = vadd.f32 %v330, %v282
    %v355 = vadd.f32 %v331, %v283
    %v356 = vadd.f32 %v332, %v284
    %v357 = vadd.f32 %v333, %v285
    %v358 = vadd.f32 %v334, %v286
    %v359 = vadd.f32 %v335, %v287
    %v360 = vadd.f32 %v336, %v288
    %v361 = vadd.f32 %v337, %v289
    %v362 = vmul.f32 %v98, 0.0
    %v363 = vmul.f32 %v99, 0.0
    %v364 = vmul.f32 %v100, 0.0
    %v365 = vmul.f32 %v101, 0.0
    %v366 = vmul.f32 %v102, 0.0
    %v367 = vmul.f32 %v103, 0.0
    %v368 = vmul.f32 %v104, 0.0
    %v369 = vmul.f32 %v105, 0.0
    %v370 = vmul.f32 %v106, 0.0
    %v371 = vmul.f32 %v107, 0.0
    %v372 = vmul.f32 %v108, 0.0
    %v373 = vmul.f32 %v109, 0.0
    %v374 = vmul.f32 %v110, 0.0
    %v375 = vmul.f32 %v111, 0.0
    %v376 = vmul.f32 %v112, 0.0
    %v377 = vmul.f32 %v113, 0.0
    %v378 = vmul.f32 %v114, 0.0
    %v379 = vmul.f32 %v115, 0.0
    %v380 = vmul.f32 %v116, 0.0
    %v381 = vmul.f32 %v117, 0.0
    %v382 = vmul.f32 %v118, 0.0
    %v383 = vmul.f32 %v119, 0.0
    %v384 = vmul.f32 %v120, 0.0
    %v385 = vmul.f32 %v121, 0.0
    %v386 = vadd.f32 %v362, -0.5
    %v387 = vadd.f32 %v363, -0.5
    %v388 = vadd.f32 %v364, -0.5
    %v389 = vadd.f32 %v365, -0.5
    %v390 = vadd.f32 %v366, -0.5
    %v391 = vadd.f32 %v367, -0.5
    %v392 = vadd.f32 %v368, -0.5
    %v393 = vadd.f32 %v369, -0.5
    %v394 = vadd.f32 %v370, -0.5
    %v395 = vadd.f32 %v371, -0.5
    %v396 = vadd.f32 %v372, -0.5
    %v397 = vadd.f32 %v373, -0.5
    %v398 = vadd.f32 %v374, -0.5
    %v399 = vadd.f32 %v375, -0.5
    %v400 = vadd.f32 %v376, -0.5
    %v401 = vadd.f32 %v377, -0.5
    %v402 = vadd.f32 %v378, -0.5
    %v403 = vadd.f32 %v379, -0.5
    %v404 = vadd.f32 %v380, -0.5
    %v405 = vadd.f32 %v381, -0.5
    %v406 = vadd.f32 %v382, -0.5
    %v407 = vadd.f32 %v383, -0.5
    %v408 = vadd.f32 %v384, -0.5
    %v409 = vadd.f32 %v385, -0.5
    %v410 = vmul.f32 %v338, %v386
    %v411 = vmul.f32 %v339, %v387
    %v412 = vmul.f32 %v340, %v388
    %v413 = vmul.f32 %v341, %v389
    %v414 = vmul.f32 %v342, %v390
    %v415 = vmul.f32 %v343, %v391
    %v416 = vmul.f32 %v344, %v392
    %v417 = vmul.f32 %v345, %v393
    %v418 = vmul.f32 %v346, %v394
    %v419 = vmul.f32 %v347, %v395
    %v420 = vmul.f32 %v348, %v396
    %v421 = vmul.f32 %v349, %v397
    %v422 = vmul.f32 %v350, %v398
    %v423 = vmul.f32 %v351, %v399
    %v424 = vmul.f32 %v352, %v400
    %v425 = vmul.f32 %v353, %v401
    %v426 = vmul.f32 %v354, %v402
    %v427 = vmul.f32 %v355, %v403
    %v428 = vmul.f32 %v356, %v404
    %v429 = vmul.f32 %v357, %v405
    %v430 = vmul.f32 %v358, %v406
    %v431 = vmul.f32 %v359, %v407
    %v432 = vmul.f32 %v360, %v408
    %v433 = vmul.f32 %v361, %v409
    %v434 = vld [vmem:[#allocation2] sm:$0xff]
    %v435 = vld [vmem:[#allocation2 + $0x8] sm:$0xff]
    %v436 = vld [vmem:[#allocation2 + $0x10] sm:$0xff]
    %v437 = vld [vmem:[#allocation2 + $0x18] sm:$0xff]
    %v438 = vld [vmem:[#allocation2 + $0x20] sm:$0xff]
    %v439 = vld [vmem:[#allocation2 + $0x28] sm:$0xff]
    %v440 = vld [vmem:[#allocation2 + $0x30] sm:$0xff]
    %v441 = vld [vmem:[#allocation2 + $0x38] sm:$0xff]
    %v442 = vadd.f32 %v410, %v418
    %v443 = vadd.f32 %v442, %v426
    %v444 = vadd.f32 %v411, %v419
    %v445 = vadd.f32 %v444, %v427
    %v446 = vadd.f32 %v412, %v420
    %v447 = vadd.f32 %v446, %v428
    %v448 = vadd.f32 %v413, %v421
    %v449 = vadd.f32 %v448, %v429
    %v450 = vadd.f32 %v414, %v422
    %v451 = vadd.f32 %v450, %v430
    %v452 = vadd.f32 %v415, %v423
    %v453 = vadd.f32 %v452, %v431
    %v454 = vadd.f32 %v416, %v424
    %v455 = vadd.f32 %v454, %v432
    %v456 = vadd.f32 %v417, %v425
    %v457 = vadd.f32 %v456, %v433
    %v458 = vadd.f32 %v434, %v443
    %v459 = vadd.f32 %v435, %v445
    %v460 = vadd.f32 %v436, %v447
    %v461 = vadd.f32 %v437, %v449
    %v462 = vadd.f32 %v438, %v451
    %v463 = vadd.f32 %v439, %v453
    %v464 = vadd.f32 %v440, %v455
    %v465 = vadd.f32 %v441, %v457
    %466 = vst [vmem:[#allocation2] sm:$0xff] %v458
    %467 = vst [vmem:[#allocation2 + $0x8] sm:$0xff] %v459
    %468 = vst [vmem:[#allocation2 + $0x10] sm:$0xff] %v460
    %469 = vst [vmem:[#allocation2 + $0x18] sm:$0xff] %v461
    %470 = vst [vmem:[#allocation2 + $0x20] sm:$0xff] %v462
    %471 = vst [vmem:[#allocation2 + $0x28] sm:$0xff] %v463
    %472 = vst [vmem:[#allocation2 + $0x30] sm:$0xff] %v464
    %473 = vst [vmem:[#allocation2 + $0x38] sm:$0xff] %v465
    // Predicated region
    $region22: #{tpu_custom_call.1} parent=1 // pred_check
      %p474 = pneg %p62
    $region23: #{tpu_custom_call.1} parent=1 // pred_check_branch
      %476 = sbr.rel (%p474) target = $region25
    $region24: #{tpu_custom_call.1} parent=1 // pred_region
      %v477 = vld [vmem:[#allocation2] sm:$0xff]
      %v478 = vld [vmem:[#allocation2 + $0x8] sm:$0xff]
      %v479 = vld [vmem:[#allocation2 + $0x10] sm:$0xff]
      %v480 = vld [vmem:[#allocation2 + $0x18] sm:$0xff]
      %v481 = vld [vmem:[#allocation2 + $0x20] sm:$0xff]
      %v482 = vld [vmem:[#allocation2 + $0x28] sm:$0xff]
      %v483 = vld [vmem:[#allocation2 + $0x30] sm:$0xff]
      %v484 = vld [vmem:[#allocation2 + $0x38] sm:$0xff]
      %v485 = vadd.f32 %v477, %v478
      %v486 = vadd.f32 %v485, %v479
      %v487 = vadd.f32 %v486, %v480
      %v488 = vadd.f32 %v487, %v481
      %v489 = vadd.f32 %v488, %v482
      %v490 = vadd.f32 %v489, %v483
      %v491 = vadd.f32 %v490, %v484
      %492 = vadd.xlane.f32.xlu0 %v491
      %v493 = vpop.xlane.xlu0 %492
      %v494 = vrot.slane %v493, 4
      %v495 = vadd.f32 %v493, %v494
      %v496 = vrot.slane %v495, 2
      %v497 = vadd.f32 %v495, %v496
      %v498 = vrot.slane %v497, 1
      %v499 = vadd.f32 %v497, %v498
      %s500 = vtos %v499
      %s501 = scalar_lea.smem [#allocation8], 0
      %502 = sst [smem:[%s501]] %s500
    $region25: #{tpu_custom_call.1} parent=1 // pred_fallthru
      _
    // Predicated region
    $region26: #{tpu_custom_call.1} parent=1 // pred_check
      _
    $region27: #{tpu_custom_call.1} parent=1 // pred_check_branch
      %504 = sbr.rel (0) target = $region29
    $region28: #{tpu_custom_call.1} parent=1 // pred_region
      %s506 = ssub.s32 16, 16
      %507 = vsyncadd [#allocation5], %s506
      %510 = dma.smem_to_hbm [#allocation8], 16, %s2, [#allocation5]
    $region29: #{tpu_custom_call.1} parent=1 // pred_fallthru
      _
    // Predicated region
    $region30: #{tpu_custom_call.1} parent=1 // pred_check
      _
    $region31: #{tpu_custom_call.1} parent=1 // pred_check_branch
      %512 = sbr.rel (0) target = $region33
    $region32: #{tpu_custom_call.1} parent=1 // pred_region
      %513 = dma.done [#allocation5], 16
    $region33: #{tpu_custom_call.1} parent=1 // pred_fallthru
      _
    %514 = sfence
    %515 = vsyncpa [#allocation4], 1
    %516 = vsyncpa [#allocation7], 1
    %517 = vsyncpa [#allocation5], 1

</llo_original>
